<compile_context>
chip_gen: v7x
topology: tpu7x:2x2x1
jax: 0.10.0
libtpu: 0.0.40
codegen_flags: <defaults>
</compile_context>

<pallas_src>
import functools

import jax
import jax.numpy as jnp
from jax.experimental import pallas as pl
from jax.experimental.pallas import tpu as pltpu


_LANE = 128
_TARGET_BLOCK_BYTES = 4 * 1024 * 1024   # ~0.5-4 MiB/block measured near HBM roofline


def _round_up(x, m):
    return (x + m - 1) // m * m


def _vmem_limit_bytes():
    """Half of physical VMEM, capped at 64 MiB (=> 64 MiB v5e/v6e, 32 MiB v7x)."""
    cap = None
    try:
        cap = pltpu.get_tpu_info().vmem_capacity_bytes
    except Exception:
        cap = None
    if not cap:
        cap = 64 * 1024 * 1024
    return int(min(64 * 1024 * 1024, max(16 * 1024 * 1024, cap // 2)))


def _choose_tile_n(n, c, itemsize, vmem_limit):
    """Byte-targeted batch tile; multiple of 128 rows for lane-dense stores."""
    c_pad = _round_up(c, _LANE)  # class axis is lane-padded inside VMEM
    # VMEM bytes per batch row: 2 inputs x 2 pipeline buffers (input dtype)
    # + ~3 full-width f32 temporaries inside the kernel (log_pred, e, t).
    vmem_per_row = 2 * 2 * c_pad * itemsize + 3 * c_pad * 4
    budget_rows = int(0.8 * vmem_limit) // vmem_per_row
    # HBM-side per-input block target (actual c columns, input dtype).
    target_rows = max(_LANE, _TARGET_BLOCK_BYTES // max(1, c * itemsize))
    tile = min(budget_rows, target_rows, _round_up(n, _LANE))
    tile = max(_LANE, (tile // _LANE) * _LANE)
    # TODO(synk): very large class counts (c_pad >~ 15k at 64 MiB, ~7k at 32 MiB)
    # would need class-axis tiling (two-pass softmax) to stay within VMEM.
    return tile


def _sce_rows_kernel(labels_ref, pred_ref, out_ref, *, neg_alpha, neg_beta):
    """Per-row SCE loss for one (TILE_N, C) batch tile -> lane-dense (1, TILE_N)."""
    labels = labels_ref[...].astype(jnp.float32)
    pred = pred_ref[...].astype(jnp.float32)

    # --- CE term uses log of the *raw* predictions (as in the reference). ---
    log_pred = jnp.log(pred)

    # --- softmax over the class axis.  Precondition inherited from the reference
    # (it needs log(pred) finite): pred is probability-like (0 < pred <~ 1), so
    # exp() cannot overflow and the max-subtraction is skipped (saves a
    # per-element subtract and a row-wide XLU reduce). ---
    e = jnp.exp(pred)
    denom = jnp.sum(e, axis=1, keepdims=True)
    inv = pl.reciprocal(denom, approx=False)            # exact 1/denom, one per row
    p_soft = jnp.clip(e * inv, 1e-7, 1.0)

    log_lbl = jnp.log(jnp.clip(labels, 1e-4, 1.0))

    # --- alpha*ce + beta*rce fused, negations folded into trace-time constants. ---
    t = neg_alpha * (labels * log_pred) + neg_beta * (p_soft * log_lbl)

    # Row reduction, then relayout the per-row sums from a sublane column to a
    # lane row so the store is lane-dense (tile_n/128 vregs instead of tile_n/8
    # single-lane masked stores that would otherwise bind the single store slot).
    row = jnp.sum(t, axis=1)                            # (TILE_N,)
    out_ref[...] = row[None, :]                         # (1, TILE_N)


def sce_loss(labels, pred, *, alpha=0.1, beta=1.0, reduction="mean",
             rce_weight=None, tile_n=None):
    """labels, pred: (N, C).  Returns scalar ('mean') or (N,) ('none').

    Inputs may be bf16 (they stay bf16 HBM-side; all math is f32 in VMEM).
    """
    assert labels.shape == pred.shape and labels.ndim == 2
    assert reduction in ("mean", "none")
    if rce_weight is not None:
        # TODO(synk): only a scalar rce_weight is supported (tensor-valued weights
        # would need an extra per-row input to the kernel).
        beta = float(rce_weight)

    n, c = labels.shape
    vmem_limit = _vmem_limit_bytes()
    itemsize = max(jnp.dtype(labels.dtype).itemsize, jnp.dtype(pred.dtype).itemsize)
    if tile_n is None:
        tile_n = _choose_tile_n(n, c, itemsize, vmem_limit)
    assert tile_n % _LANE == 0 and tile_n >= _LANE

    n_pad = _round_up(n, tile_n)
    if n_pad != n:
        # Padded rows (labels = pred = 1) contribute exactly 0 and are NaN-free;
        # they are sliced off before the final reduction.  jnp.pad preserves the
        # input dtype, so bf16 inputs stay bf16 in HBM.
        pad = ((0, n_pad - n), (0, 0))
        labels = jnp.pad(labels, pad, constant_values=1.0)
        pred = jnp.pad(pred, pad, constant_values=1.0)
    num_tiles = n_pad // tile_n

    kernel = functools.partial(
        _sce_rows_kernel, neg_alpha=-float(alpha), neg_beta=-float(beta))

    rows = pl.pallas_call(
        kernel,
        out_shape=jax.ShapeDtypeStruct((1, n_pad), jnp.float32),
        grid=(num_tiles,),
        in_specs=[
            pl.BlockSpec((tile_n, c), lambda i: (i, 0)),
            pl.BlockSpec((tile_n, c), lambda i: (i, 0)),
        ],
        out_specs=pl.BlockSpec((1, tile_n), lambda i: (0, i)),
        compiler_params=pltpu.CompilerParams(
            dimension_semantics=("parallel",),
            vmem_limit_bytes=vmem_limit,
        ),
    )(labels, pred)

    rows = rows[0, :n]
    if reduction == "mean":
        # Two-level reduction: per-row losses in the kernel, mean over the true
        # batch size here (grid stays 'parallel' across cores).
        return jnp.mean(rows)
    return rows


def _sce_loss_ref(labels, pred, *, alpha=0.1, beta=1.0, reduction="mean"):
    """Plain-JAX reference mirroring the PyTorch code."""
    ce_rows = jnp.sum(-labels * jnp.log(pred), axis=1)
    p = jax.nn.softmax(pred, axis=1)
    p = jnp.clip(p, 1e-7, 1.0)
    lbl = jnp.clip(labels, 1e-4, 1.0)
    rce_rows = jnp.sum(-p * jnp.log(lbl), axis=1)
    if reduction == "mean":
        return alpha * jnp.mean(ce_rows) + beta * jnp.mean(rce_rows)
    return alpha * ce_rows + beta * rce_rows


if __name__ == "__main__":
    key = jax.random.PRNGKey(0)
    k1, k2, k3, k4 = jax.random.split(key, 4)

    # Small soft-label / probability-like prediction rows (pred must be > 0).
    N, C = 8, 32
    labels = jax.nn.softmax(4.0 * jax.random.normal(k1, (N, C)), axis=1).astype(jnp.float32)
    pred = jax.nn.softmax(jax.random.normal(k2, (N, C)), axis=1).astype(jnp.float32)

    loss = jax.block_until_ready(sce_loss(labels, pred, reduction="mean"))
    ref = _sce_loss_ref(labels, pred, reduction="mean")
    assert jnp.allclose(loss, ref, rtol=1e-5, atol=1e-5), (loss, ref)

    loss_none = jax.block_until_ready(sce_loss(labels, pred, reduction="none"))
    ref_none = _sce_loss_ref(labels, pred, reduction="none")
    assert jnp.allclose(loss_none, ref_none, rtol=1e-5, atol=1e-5)

    # rce_weight override replaces beta (scalar).
    loss_w = jax.block_until_ready(sce_loss(labels, pred, reduction="mean", rce_weight=0.5))
    ref_w = _sce_loss_ref(labels, pred, beta=0.5, reduction="mean")
    assert jnp.allclose(loss_w, ref_w, rtol=1e-5, atol=1e-5), (loss_w, ref_w)

    # Multi-tile + ragged batch + C not a multiple of 128: exercises grid
    # pipelining, row padding and the lane-dense output path.
    N2, C2 = 300, 160
    labels2 = jax.nn.softmax(2.0 * jax.random.normal(k3, (N2, C2)), axis=1).astype(jnp.float32)
    pred2 = jax.nn.softmax(jax.random.normal(k4, (N2, C2)), axis=1).astype(jnp.float32)
    for red in ("mean", "none"):
        got = jax.block_until_ready(sce_loss(labels2, pred2, reduction=red, tile_n=128))
        want = _sce_loss_ref(labels2, pred2, reduction=red)
        assert jnp.allclose(got, want, rtol=1e-5, atol=1e-5), red

    # bf16 HBM-side inputs (kernel upcasts to f32 internally).
    labels_bf = labels2.astype(jnp.bfloat16)
    pred_bf = pred2.astype(jnp.bfloat16)
    got_bf = jax.block_until_ready(sce_loss(labels_bf, pred_bf, reduction="mean"))
    want_bf = _sce_loss_ref(labels_bf.astype(jnp.float32), pred_bf.astype(jnp.float32),
                            reduction="mean")
    assert jnp.allclose(got_bf, want_bf, rtol=1e-4, atol=1e-4), (got_bf, want_bf)

    print("KERNEL_OK")
</pallas_src>

<mosaic_0001>
module attributes {stable_mosaic.version = 11 : i64} {
  func.func @_sce_rows_kernel(%arg0: i32, %arg1: memref<128x32xf32, #tpu.memory_space<vmem>>, %arg2: memref<128x32xf32, #tpu.memory_space<vmem>>, %arg3: memref<1x128xf32, #tpu.memory_space<vmem>>) attributes {dimension_semantics = [#tpu.dimension_semantics<parallel>], iteration_bounds = array<i64: 1>, scalar_prefetch = 0 : i64, scratch_operands = 0 : i64, tpu.core_type = #tpu.core_type<tc>, window_params = [{transform_indices = @transform_0, window_bounds = array<i64: 128, 32>}, {transform_indices = @transform_1, window_bounds = array<i64: 128, 32>}, {transform_indices = @transform_2, window_bounds = array<i64: 1, 128>}]} {
    %c0 = arith.constant 0 : index
    %c0_0 = arith.constant 0 : index
    %0 = vector.load %arg1[%c0, %c0_0] : memref<128x32xf32, #tpu.memory_space<vmem>>, vector<128x32xf32>
    %c0_1 = arith.constant 0 : index
    %c0_2 = arith.constant 0 : index
    %1 = vector.load %arg2[%c0_1, %c0_2] : memref<128x32xf32, #tpu.memory_space<vmem>>, vector<128x32xf32>
    %2 = math.log %1 : vector<128x32xf32>
    %3 = math.exp %1 : vector<128x32xf32>
    %cst = arith.constant dense<0.000000e+00> : vector<128xf32>
    %4 = vector.multi_reduction <add>, %3, %cst [1] : vector<128x32xf32> to vector<128xf32>
    %5 = vector.shape_cast %4 : vector<128xf32> to vector<128x1xf32>
    %6 = tpu.reciprocal %5 : vector<128x1xf32> -> vector<128x1xf32>
    %7 = vector.broadcast %6 : vector<128x1xf32> to vector<128x32xf32>
    %8 = arith.mulf %3, %7 : vector<128x32xf32>
    %cst_3 = arith.constant 1.000000e-07 : f32
    %cst_4 = arith.constant 1.000000e+00 : f32
    %9 = vector.broadcast %cst_3 : f32 to vector<128x32xf32>
    %10 = arith.maximumf %9, %8 : vector<128x32xf32>
    %11 = vector.broadcast %cst_4 : f32 to vector<128x32xf32>
    %12 = arith.minimumf %11, %10 : vector<128x32xf32>
    %cst_5 = arith.constant 9.99999974E-5 : f32
    %cst_6 = arith.constant 1.000000e+00 : f32
    %13 = vector.broadcast %cst_5 : f32 to vector<128x32xf32>
    %14 = arith.maximumf %13, %0 : vector<128x32xf32>
    %15 = vector.broadcast %cst_6 : f32 to vector<128x32xf32>
    %16 = arith.minimumf %15, %14 : vector<128x32xf32>
    %17 = math.log %16 : vector<128x32xf32>
    %18 = arith.mulf %0, %2 : vector<128x32xf32>
    %cst_7 = arith.constant -1.000000e-01 : f32
    %19 = vector.broadcast %cst_7 : f32 to vector<128x32xf32>
    %20 = arith.mulf %19, %18 : vector<128x32xf32>
    %21 = arith.mulf %12, %17 : vector<128x32xf32>
    %cst_8 = arith.constant -1.000000e+00 : f32
    %22 = vector.broadcast %cst_8 : f32 to vector<128x32xf32>
    %23 = arith.mulf %22, %21 : vector<128x32xf32>
    %24 = arith.addf %20, %23 : vector<128x32xf32>
    %cst_9 = arith.constant dense<0.000000e+00> : vector<128xf32>
    %25 = vector.multi_reduction <add>, %24, %cst_9 [1] : vector<128x32xf32> to vector<128xf32>
    %26 = vector.shape_cast %25 : vector<128xf32> to vector<1x128xf32>
    %c0_10 = arith.constant 0 : index
    %c0_11 = arith.constant 0 : index
    %27 = vector.load %arg3[%c0_10, %c0_11] : memref<1x128xf32, #tpu.memory_space<vmem>>, vector<1x128xf32>
    tpu.vector_store %arg3[%c0_10, %c0_11], %26 {strides = array<i32>} : memref<1x128xf32, #tpu.memory_space<vmem>>, vector<1x128xf32>,
    return
  }
  func.func @transform_0(%arg0: i32) -> (i32, i32) {
    %c0_i32 = arith.constant 0 : i32
    %c0_i32_0 = arith.constant 0 : i32
    return %arg0, %c0_i32 : i32, i32
  }
  func.func @transform_1(%arg0: i32) -> (i32, i32) {
    %c0_i32 = arith.constant 0 : i32
    %c0_i32_0 = arith.constant 0 : i32
    return %arg0, %c0_i32 : i32, i32
  }
  func.func @transform_2(%arg0: i32) -> (i32, i32) {
    %c0_i32 = arith.constant 0 : i32
    %c0_i32_0 = arith.constant 0 : i32
    return %c0_i32, %arg0 : i32, i32
  }
}

</mosaic_0001>

<llo_original>
// kernel: tpu_custom_call.1
$region0: #{tpu_custom_call.1}
  #allocation0 [shape = 'u32[]', space=smem, size = 0x4, offset = 0x4, fixed_abs, tag = 'smem constant byte address 0x4 - core index']
  #allocation1 [shape = 'u32[144,128]{1,0:T(1,128)}', space=vmem, size = 0x12000, scoped, tag = 'internal scratch']
  %s0 = inlined_call_operand.vmem [shape: f32[128,32], index: 0, kind: input, shape index: {}]
  %s1 = inlined_call_operand.vmem [shape: f32[128,32], index: 1, kind: input, shape index: {}]
  %s2 = inlined_call_operand.hbm [shape: f32[1,128], index: 2, kind: output, shape index: {}]
  %s3 = sld [smem:[#allocation0]]
  $region18: #{tpu_custom_call.1} parent=0
    _
  %s5 = ssub.s32 1, %s3
  %s6 = scalar_select 0, %s5, %s3
  $region1: #{tpu_custom_call.1} parent=0
    #allocation2 [shape = 'u8[512]{0}', space=vmem, size = 0x400, scoped, tag = 'output window, operand 0, single buffered']
    #allocation3 [shape = 's32[1]{0}', space=sflag, size = 0x4, scoped, tag = 'scoped memory for tpu_custom_call.1']
    %7 = vsyncpa [#allocation3], 0
    // Predicated region
    $region2: #{tpu_custom_call.1} parent=1 // pred_check
      _
    $region3: #{tpu_custom_call.1} parent=1 // pred_check_branch
      %9 = sbr.rel (0) target = $region5
    $region4: #{tpu_custom_call.1} parent=1 // pred_region
      _
    $region5: #{tpu_custom_call.1} parent=1 // pred_fallthru
      _
    // Predicated region
    $region6: #{tpu_custom_call.1} parent=1 // pred_check
      _
    $region7: #{tpu_custom_call.1} parent=1 // pred_check_branch
      %11 = sbr.rel (0) target = $region9
    $region8: #{tpu_custom_call.1} parent=1 // pred_region
      _
    $region9: #{tpu_custom_call.1} parent=1 // pred_fallthru
      _
    %v12 = vld [vmem:[%s0] sm:$0xff]
    %v13 = vld [vmem:[%s0 + $0x8] sm:$0xff]
    %v14 = vld [vmem:[%s0 + $0x10] sm:$0xff]
    %v15 = vld [vmem:[%s0 + $0x18] sm:$0xff]
    %v16 = vld [vmem:[%s0 + $0x20] sm:$0xff]
    %v17 = vld [vmem:[%s0 + $0x28] sm:$0xff]
    %v18 = vld [vmem:[%s0 + $0x30] sm:$0xff]
    %v19 = vld [vmem:[%s0 + $0x38] sm:$0xff]
    %v20 = vld [vmem:[%s0 + $0x40] sm:$0xff]
    %v21 = vld [vmem:[%s0 + $0x48] sm:$0xff]
    %v22 = vld [vmem:[%s0 + $0x50] sm:$0xff]
    %v23 = vld [vmem:[%s0 + $0x58] sm:$0xff]
    %v24 = vld [vmem:[%s0 + $0x60] sm:$0xff]
    %v25 = vld [vmem:[%s0 + $0x68] sm:$0xff]
    %v26 = vld [vmem:[%s0 + $0x70] sm:$0xff]
    %v27 = vld [vmem:[%s0 + $0x78] sm:$0xff]
    %v28 = vld [vmem:[%s1] sm:$0xff]
    %v29 = vld [vmem:[%s1 + $0x8] sm:$0xff]
    %v30 = vld [vmem:[%s1 + $0x10] sm:$0xff]
    %v31 = vld [vmem:[%s1 + $0x18] sm:$0xff]
    %v32 = vld [vmem:[%s1 + $0x20] sm:$0xff]
    %v33 = vld [vmem:[%s1 + $0x28] sm:$0xff]
    %v34 = vld [vmem:[%s1 + $0x30] sm:$0xff]
    %v35 = vld [vmem:[%s1 + $0x38] sm:$0xff]
    %v36 = vld [vmem:[%s1 + $0x40] sm:$0xff]
    %v37 = vld [vmem:[%s1 + $0x48] sm:$0xff]
    %v38 = vld [vmem:[%s1 + $0x50] sm:$0xff]
    %v39 = vld [vmem:[%s1 + $0x58] sm:$0xff]
    %v40 = vld [vmem:[%s1 + $0x60] sm:$0xff]
    %v41 = vld [vmem:[%s1 + $0x68] sm:$0xff]
    %v42 = vld [vmem:[%s1 + $0x70] sm:$0xff]
    %v43 = vld [vmem:[%s1 + $0x78] sm:$0xff]
    %v44 = vlog2.pop %v28
    %v45 = vmul.f32 %v44, 0.6931472
    %v46 = vlog2.pop %v29
    %v47 = vmul.f32 %v46, 0.6931472
    %v48 = vlog2.pop %v30
    %v49 = vmul.f32 %v48, 0.6931472
    %v50 = vlog2.pop %v31
    %v51 = vmul.f32 %v50, 0.6931472
    %v52 = vlog2.pop %v32
    %v53 = vmul.f32 %v52, 0.6931472
    %v54 = vlog2.pop %v33
    %v55 = vmul.f32 %v54, 0.6931472
    %v56 = vlog2.pop %v34
    %v57 = vmul.f32 %v56, 0.6931472
    %v58 = vlog2.pop %v35
    %v59 = vmul.f32 %v58, 0.6931472
    %v60 = vlog2.pop %v36
    %v61 = vmul.f32 %v60, 0.6931472
    %v62 = vlog2.pop %v37
    %v63 = vmul.f32 %v62, 0.6931472
    %v64 = vlog2.pop %v38
    %v65 = vmul.f32 %v64, 0.6931472
    %v66 = vlog2.pop %v39
    %v67 = vmul.f32 %v66, 0.6931472
    %v68 = vlog2.pop %v40
    %v69 = vmul.f32 %v68, 0.6931472
    %v70 = vlog2.pop %v41
    %v71 = vmul.f32 %v70, 0.6931472
    %v72 = vlog2.pop %v42
    %v73 = vmul.f32 %v72, 0.6931472
    %v74 = vlog2.pop %v43
    %v75 = vmul.f32 %v74, 0.6931472
    %v76 = vmul.f32 %v28, 1.442695
    %v77 = vpow.pop %v76
    %v78 = vmul.f32 %v29, 1.442695
    %v79 = vpow.pop %v78
    %v80 = vmul.f32 %v30, 1.442695
    %v81 = vpow.pop %v80
    %v82 = vmul.f32 %v31, 1.442695
    %v83 = vpow.pop %v82
    %v84 = vmul.f32 %v32, 1.442695
    %v85 = vpow.pop %v84
    %v86 = vmul.f32 %v33, 1.442695
    %v87 = vpow.pop %v86
    %v88 = vmul.f32 %v34, 1.442695
    %v89 = vpow.pop %v88
    %v90 = vmul.f32 %v35, 1.442695
    %v91 = vpow.pop %v90
    %v92 = vmul.f32 %v36, 1.442695
    %v93 = vpow.pop %v92
    %v94 = vmul.f32 %v37, 1.442695
    %v95 = vpow.pop %v94
    %v96 = vmul.f32 %v38, 1.442695
    %v97 = vpow.pop %v96
    %v98 = vmul.f32 %v39, 1.442695
    %v99 = vpow.pop %v98
    %v100 = vmul.f32 %v40, 1.442695
    %v101 = vpow.pop %v100
    %v102 = vmul.f32 %v41, 1.442695
    %v103 = vpow.pop %v102
    %v104 = vmul.f32 %v42, 1.442695
    %v105 = vpow.pop %v104
    %v106 = vmul.f32 %v43, 1.442695
    %v107 = vpow.pop %v106
    %vm108 = vcmask 261120
    %v109 = vsel %vm108, %v77, 0.0
    %110 = vadd.xlane.f32.xlu0 %v109
    %v111 = vpop.xlane.xlu0 %110
    %v112 = vsel %vm108, %v79, 0.0
    %113 = vadd.xlane.f32.xlu0 %v112
    %v114 = vpop.xlane.xlu0 %113
    %v115 = vsel %vm108, %v81, 0.0
    %116 = vadd.xlane.f32.xlu0 %v115
    %v117 = vpop.xlane.xlu0 %116
    %v118 = vsel %vm108, %v83, 0.0
    %119 = vadd.xlane.f32.xlu0 %v118
    %v120 = vpop.xlane.xlu0 %119
    %v121 = vsel %vm108, %v85, 0.0
    %122 = vadd.xlane.f32.xlu0 %v121
    %v123 = vpop.xlane.xlu0 %122
    %v124 = vsel %vm108, %v87, 0.0
    %125 = vadd.xlane.f32.xlu0 %v124
    %v126 = vpop.xlane.xlu0 %125
    %v127 = vsel %vm108, %v89, 0.0
    %128 = vadd.xlane.f32.xlu0 %v127
    %v129 = vpop.xlane.xlu0 %128
    %v130 = vsel %vm108, %v91, 0.0
    %131 = vadd.xlane.f32.xlu0 %v130
    %v132 = vpop.xlane.xlu0 %131
    %v133 = vsel %vm108, %v93, 0.0
    %134 = vadd.xlane.f32.xlu0 %v133
    %v135 = vpop.xlane.xlu0 %134
    %v136 = vsel %vm108, %v95, 0.0
    %137 = vadd.xlane.f32.xlu0 %v136
    %v138 = vpop.xlane.xlu0 %137
    %v139 = vsel %vm108, %v97, 0.0
    %140 = vadd.xlane.f32.xlu0 %v139
    %v141 = vpop.xlane.xlu0 %140
    %v142 = vsel %vm108, %v99, 0.0
    %143 = vadd.xlane.f32.xlu0 %v142
    %v144 = vpop.xlane.xlu0 %143
    %v145 = vsel %vm108, %v101, 0.0
    %146 = vadd.xlane.f32.xlu0 %v145
    %v147 = vpop.xlane.xlu0 %146
    %v148 = vsel %vm108, %v103, 0.0
    %149 = vadd.xlane.f32.xlu0 %v148
    %v150 = vpop.xlane.xlu0 %149
    %v151 = vsel %vm108, %v105, 0.0
    %152 = vadd.xlane.f32.xlu0 %v151
    %v153 = vpop.xlane.xlu0 %152
    %v154 = vsel %vm108, %v107, 0.0
    %155 = vadd.xlane.f32.xlu0 %v154
    %v156 = vpop.xlane.xlu0 %155
    %v157 = vrcp.pop %v111
    %v158 = vrcp.pop %v114
    %v159 = vrcp.pop %v117
    %v160 = vrcp.pop %v120
    %v161 = vrcp.pop %v123
    %v162 = vrcp.pop %v126
    %v163 = vrcp.pop %v129
    %v164 = vrcp.pop %v132
    %v165 = vrcp.pop %v135
    %v166 = vrcp.pop %v138
    %v167 = vrcp.pop %v141
    %v168 = vrcp.pop %v144
    %v169 = vrcp.pop %v147
    %v170 = vrcp.pop %v150
    %v171 = vrcp.pop %v153
    %v172 = vrcp.pop %v156
    %v173 = vmul.f32 %v77, %v157
    %v174 = vmul.f32 %v79, %v158
    %v175 = vmul.f32 %v81, %v159
    %v176 = vmul.f32 %v83, %v160
    %v177 = vmul.f32 %v85, %v161
    %v178 = vmul.f32 %v87, %v162
    %v179 = vmul.f32 %v89, %v163
    %v180 = vmul.f32 %v91, %v164
    %v181 = vmul.f32 %v93, %v165
    %v182 = vmul.f32 %v95, %v166
    %v183 = vmul.f32 %v97, %v167
    %v184 = vmul.f32 %v99, %v168
    %v185 = vmul.f32 %v101, %v169
    %v186 = vmul.f32 %v103, %v170
    %v187 = vmul.f32 %v105, %v171
    %v188 = vmul.f32 %v107, %v172
    %v189 = vmax.f32 %v173, 1e-07
    %v190 = vmax.f32 %v174, 1e-07
    %v191 = vmax.f32 %v175, 1e-07
    %v192 = vmax.f32 %v176, 1e-07
    %v193 = vmax.f32 %v177, 1e-07
    %v194 = vmax.f32 %v178, 1e-07
    %v195 = vmax.f32 %v179, 1e-07
    %v196 = vmax.f32 %v180, 1e-07
    %v197 = vmax.f32 %v181, 1e-07
    %v198 = vmax.f32 %v182, 1e-07
    %v199 = vmax.f32 %v183, 1e-07
    %v200 = vmax.f32 %v184, 1e-07
    %v201 = vmax.f32 %v185, 1e-07
    %v202 = vmax.f32 %v186, 1e-07
    %v203 = vmax.f32 %v187, 1e-07
    %v204 = vmax.f32 %v188, 1e-07
    %v205 = vmin.f32 %v189, 1.0
    %v206 = vmin.f32 %v190, 1.0
    %v207 = vmin.f32 %v191, 1.0
    %v208 = vmin.f32 %v192, 1.0
    %v209 = vmin.f32 %v193, 1.0
    %v210 = vmin.f32 %v194, 1.0
    %v211 = vmin.f32 %v195, 1.0
    %v212 = vmin.f32 %v196, 1.0
    %v213 = vmin.f32 %v197, 1.0
    %v214 = vmin.f32 %v198, 1.0
    %v215 = vmin.f32 %v199, 1.0
    %v216 = vmin.f32 %v200, 1.0
    %v217 = vmin.f32 %v201, 1.0
    %v218 = vmin.f32 %v202, 1.0
    %v219 = vmin.f32 %v203, 1.0
    %v220 = vmin.f32 %v204, 1.0
    %v221 = vmax.f32 %v12, 0.0001
    %v222 = vmax.f32 %v13, 0.0001
    %v223 = vmax.f32 %v14, 0.0001
    %v224 = vmax.f32 %v15, 0.0001
    %v225 = vmax.f32 %v16, 0.0001
    %v226 = vmax.f32 %v17, 0.0001
    %v227 = vmax.f32 %v18, 0.0001
    %v228 = vmax.f32 %v19, 0.0001
    %v229 = vmax.f32 %v20, 0.0001
    %v230 = vmax.f32 %v21, 0.0001
    %v231 = vmax.f32 %v22, 0.0001
    %v232 = vmax.f32 %v23, 0.0001
    %v233 = vmax.f32 %v24, 0.0001
    %v234 = vmax.f32 %v25, 0.0001
    %v235 = vmax.f32 %v26, 0.0001
    %v236 = vmax.f32 %v27, 0.0001
    %v237 = vmin.f32 %v221, 1.0
    %v238 = vmin.f32 %v222, 1.0
    %v239 = vmin.f32 %v223, 1.0
    %v240 = vmin.f32 %v224, 1.0
    %v241 = vmin.f32 %v225, 1.0
    %v242 = vmin.f32 %v226, 1.0
    %v243 = vmin.f32 %v227, 1.0
    %v244 = vmin.f32 %v228, 1.0
    %v245 = vmin.f32 %v229, 1.0
    %v246 = vmin.f32 %v230, 1.0
    %v247 = vmin.f32 %v231, 1.0
    %v248 = vmin.f32 %v232, 1.0
    %v249 = vmin.f32 %v233, 1.0
    %v250 = vmin.f32 %v234, 1.0
    %v251 = vmin.f32 %v235, 1.0
    %v252 = vmin.f32 %v236, 1.0
    %v253 = vlog2.pop %v237
    %v254 = vmul.f32 %v253, 0.6931472
    %v255 = vlog2.pop %v238
    %v256 = vmul.f32 %v255, 0.6931472
    %v257 = vlog2.pop %v239
    %v258 = vmul.f32 %v257, 0.6931472
    %v259 = vlog2.pop %v240
    %v260 = vmul.f32 %v259, 0.6931472
    %v261 = vlog2.pop %v241
    %v262 = vmul.f32 %v261, 0.6931472
    %v263 = vlog2.pop %v242
    %v264 = vmul.f32 %v263, 0.6931472
    %v265 = vlog2.pop %v243
    %v266 = vmul.f32 %v265, 0.6931472
    %v267 = vlog2.pop %v244
    %v268 = vmul.f32 %v267, 0.6931472
    %v269 = vlog2.pop %v245
    %v270 = vmul.f32 %v269, 0.6931472
    %v271 = vlog2.pop %v246
    %v272 = vmul.f32 %v271, 0.6931472
    %v273 = vlog2.pop %v247
    %v274 = vmul.f32 %v273, 0.6931472
    %v275 = vlog2.pop %v248
    %v276 = vmul.f32 %v275, 0.6931472
    %v277 = vlog2.pop %v249
    %v278 = vmul.f32 %v277, 0.6931472
    %v279 = vlog2.pop %v250
    %v280 = vmul.f32 %v279, 0.6931472
    %v281 = vlog2.pop %v251
    %v282 = vmul.f32 %v281, 0.6931472
    %v283 = vlog2.pop %v252
    %v284 = vmul.f32 %v283, 0.6931472
    %v285 = vmul.f32 %v12, %v45
    %v286 = vmul.f32 %v13, %v47
    %v287 = vmul.f32 %v14, %v49
    %v288 = vmul.f32 %v15, %v51
    %v289 = vmul.f32 %v16, %v53
    %v290 = vmul.f32 %v17, %v55
    %v291 = vmul.f32 %v18, %v57
    %v292 = vmul.f32 %v19, %v59
    %v293 = vmul.f32 %v20, %v61
    %v294 = vmul.f32 %v21, %v63
    %v295 = vmul.f32 %v22, %v65
    %v296 = vmul.f32 %v23, %v67
    %v297 = vmul.f32 %v24, %v69
    %v298 = vmul.f32 %v25, %v71
    %v299 = vmul.f32 %v26, %v73
    %v300 = vmul.f32 %v27, %v75
    %v301 = vmul.f32 %v285, -0.1
    %v302 = vmul.f32 %v286, -0.1
    %v303 = vmul.f32 %v287, -0.1
    %v304 = vmul.f32 %v288, -0.1
    %v305 = vmul.f32 %v289, -0.1
    %v306 = vmul.f32 %v290, -0.1
    %v307 = vmul.f32 %v291, -0.1
    %v308 = vmul.f32 %v292, -0.1
    %v309 = vmul.f32 %v293, -0.1
    %v310 = vmul.f32 %v294, -0.1
    %v311 = vmul.f32 %v295, -0.1
    %v312 = vmul.f32 %v296, -0.1
    %v313 = vmul.f32 %v297, -0.1
    %v314 = vmul.f32 %v298, -0.1
    %v315 = vmul.f32 %v299, -0.1
    %v316 = vmul.f32 %v300, -0.1
    %v317 = vmul.f32 %v205, %v254
    %v318 = vmul.f32 %v206, %v256
    %v319 = vmul.f32 %v207, %v258
    %v320 = vmul.f32 %v208, %v260
    %v321 = vmul.f32 %v209, %v262
    %v322 = vmul.f32 %v210, %v264
    %v323 = vmul.f32 %v211, %v266
    %v324 = vmul.f32 %v212, %v268
    %v325 = vmul.f32 %v213, %v270
    %v326 = vmul.f32 %v214, %v272
    %v327 = vmul.f32 %v215, %v274
    %v328 = vmul.f32 %v216, %v276
    %v329 = vmul.f32 %v217, %v278
    %v330 = vmul.f32 %v218, %v280
    %v331 = vmul.f32 %v219, %v282
    %v332 = vmul.f32 %v220, %v284
    %v333 = vmul.f32 %v317, -1.0
    %v334 = vmul.f32 %v318, -1.0
    %v335 = vmul.f32 %v319, -1.0
    %v336 = vmul.f32 %v320, -1.0
    %v337 = vmul.f32 %v321, -1.0
    %v338 = vmul.f32 %v322, -1.0
    %v339 = vmul.f32 %v323, -1.0
    %v340 = vmul.f32 %v324, -1.0
    %v341 = vmul.f32 %v325, -1.0
    %v342 = vmul.f32 %v326, -1.0
    %v343 = vmul.f32 %v327, -1.0
    %v344 = vmul.f32 %v328, -1.0
    %v345 = vmul.f32 %v329, -1.0
    %v346 = vmul.f32 %v330, -1.0
    %v347 = vmul.f32 %v331, -1.0
    %v348 = vmul.f32 %v332, -1.0
    %v349 = vadd.f32 %v301, %v333
    %v350 = vadd.f32 %v302, %v334
    %v351 = vadd.f32 %v303, %v335
    %v352 = vadd.f32 %v304, %v336
    %v353 = vadd.f32 %v305, %v337
    %v354 = vadd.f32 %v306, %v338
    %v355 = vadd.f32 %v307, %v339
    %v356 = vadd.f32 %v308, %v340
    %v357 = vadd.f32 %v309, %v341
    %v358 = vadd.f32 %v310, %v342
    %v359 = vadd.f32 %v311, %v343
    %v360 = vadd.f32 %v312, %v344
    %v361 = vadd.f32 %v313, %v345
    %v362 = vadd.f32 %v314, %v346
    %v363 = vadd.f32 %v315, %v347
    %v364 = vadd.f32 %v316, %v348
    %v365 = vsel %vm108, %v349, 0.0
    %366 = vadd.xlane.f32.xlu0 %v365
    %v367 = vpop.xlane.xlu0 %366
    %v368 = vsel %vm108, %v350, 0.0
    %369 = vadd.xlane.f32.xlu0 %v368
    %v370 = vpop.xlane.xlu0 %369
    %v371 = vsel %vm108, %v351, 0.0
    %372 = vadd.xlane.f32.xlu0 %v371
    %v373 = vpop.xlane.xlu0 %372
    %v374 = vsel %vm108, %v352, 0.0
    %375 = vadd.xlane.f32.xlu0 %v374
    %v376 = vpop.xlane.xlu0 %375
    %v377 = vsel %vm108, %v353, 0.0
    %378 = vadd.xlane.f32.xlu0 %v377
    %v379 = vpop.xlane.xlu0 %378
    %v380 = vsel %vm108, %v354, 0.0
    %381 = vadd.xlane.f32.xlu0 %v380
    %v382 = vpop.xlane.xlu0 %381
    %v383 = vsel %vm108, %v355, 0.0
    %384 = vadd.xlane.f32.xlu0 %v383
    %v385 = vpop.xlane.xlu0 %384
    %v386 = vsel %vm108, %v356, 0.0
    %387 = vadd.xlane.f32.xlu0 %v386
    %v388 = vpop.xlane.xlu0 %387
    %v389 = vsel %vm108, %v357, 0.0
    %390 = vadd.xlane.f32.xlu0 %v389
    %v391 = vpop.xlane.xlu0 %390
    %v392 = vsel %vm108, %v358, 0.0
    %393 = vadd.xlane.f32.xlu0 %v392
    %v394 = vpop.xlane.xlu0 %393
    %v395 = vsel %vm108, %v359, 0.0
    %396 = vadd.xlane.f32.xlu0 %v395
    %v397 = vpop.xlane.xlu0 %396
    %v398 = vsel %vm108, %v360, 0.0
    %399 = vadd.xlane.f32.xlu0 %v398
    %v400 = vpop.xlane.xlu0 %399
    %v401 = vsel %vm108, %v361, 0.0
    %402 = vadd.xlane.f32.xlu0 %v401
    %v403 = vpop.xlane.xlu0 %402
    %v404 = vsel %vm108, %v362, 0.0
    %405 = vadd.xlane.f32.xlu0 %v404
    %v406 = vpop.xlane.xlu0 %405
    %v407 = vsel %vm108, %v363, 0.0
    %408 = vadd.xlane.f32.xlu0 %v407
    %v409 = vpop.xlane.xlu0 %408
    %v410 = vsel %vm108, %v364, 0.0
    %411 = vadd.xlane.f32.xlu0 %v410
    %v412 = vpop.xlane.xlu0 %411
    %v429 = vlaneseq
    %v430 = vand.u32 %v429, 127
    %v431 = vlaneseq
    %v432 = vshrl.u32 %v431, 7
    %v433 = vsub.s32 %v430, %v432
    %v434 = vrot.slane %v367, %v433
    %v435 = vadd.s32 %v430, 4294967288
    %v436 = vlaneseq
    %v437 = vshrl.u32 %v436, 7
    %v438 = vsub.s32 %v435, %v437
    %v439 = vrot.slane %v370, %v438
    %vm440 = vcmask 130112
    %v441 = vsel %vm440, %v439, %v434
    %v442 = vadd.s32 %v430, 4294967280
    %v443 = vlaneseq
    %v444 = vshrl.u32 %v443, 7
    %v445 = vsub.s32 %v442, %v444
    %v446 = vrot.slane %v373, %v445
    %vm447 = vcmask 195712
    %v448 = vsel %vm447, %v446, %v441
    %v449 = vadd.s32 %v430, 4294967272
    %v450 = vlaneseq
    %v451 = vshrl.u32 %v450, 7
    %v452 = vsub.s32 %v449, %v451
    %v453 = vrot.slane %v376, %v452
    %vm454 = vcmask 261312
    %v455 = vsel %vm454, %v453, %v448
    %v456 = vadd.s32 %v430, 4294967264
    %v457 = vlaneseq
    %v458 = vshrl.u32 %v457, 7
    %v459 = vsub.s32 %v456, %v458
    %v460 = vrot.slane %v379, %v459
    %vm461 = vcmask 326912
    %v462 = vsel %vm461, %v460, %v455
    %v463 = vadd.s32 %v430, 4294967256
    %v464 = vlaneseq
    %v465 = vshrl.u32 %v464, 7
    %v466 = vsub.s32 %v463, %v465
    %v467 = vrot.slane %v382, %v466
    %vm468 = vcmask 392512
    %v469 = vsel %vm468, %v467, %v462
    %v470 = vadd.s32 %v430, 4294967248
    %v471 = vlaneseq
    %v472 = vshrl.u32 %v471, 7
    %v473 = vsub.s32 %v470, %v472
    %v474 = vrot.slane %v385, %v473
    %vm475 = vcmask 458112
    %v476 = vsel %vm475, %v474, %v469
    %v477 = vadd.s32 %v430, 4294967240
    %v478 = vlaneseq
    %v479 = vshrl.u32 %v478, 7
    %v480 = vsub.s32 %v477, %v479
    %v481 = vrot.slane %v388, %v480
    %vm482 = vcmask 523712
    %v483 = vsel %vm482, %v481, %v476
    %v484 = vadd.s32 %v430, 4294967232
    %v485 = vlaneseq
    %v486 = vshrl.u32 %v485, 7
    %v487 = vsub.s32 %v484, %v486
    %v488 = vrot.slane %v391, %v487
    %vm489 = vcmask 589312
    %v490 = vsel %vm489, %v488, %v483
    %v491 = vadd.s32 %v430, 4294967224
    %v492 = vlaneseq
    %v493 = vshrl.u32 %v492, 7
    %v494 = vsub.s32 %v491, %v493
    %v495 = vrot.slane %v394, %v494
    %vm496 = vcmask 654912
    %v497 = vsel %vm496, %v495, %v490
    %v498 = vadd.s32 %v430, 4294967216
    %v499 = vlaneseq
    %v500 = vshrl.u32 %v499, 7
    %v501 = vsub.s32 %v498, %v500
    %v502 = vrot.slane %v397, %v501
    %vm503 = vcmask 720512
    %v504 = vsel %vm503, %v502, %v497
    %v505 = vadd.s32 %v430, 4294967208
    %v506 = vlaneseq
    %v507 = vshrl.u32 %v506, 7
    %v508 = vsub.s32 %v505, %v507
    %v509 = vrot.slane %v400, %v508
    %vm510 = vcmask 786112
    %v511 = vsel %vm510, %v509, %v504
    %v512 = vadd.s32 %v430, 4294967200
    %v513 = vlaneseq
    %v514 = vshrl.u32 %v513, 7
    %v515 = vsub.s32 %v512, %v514
    %v516 = vrot.slane %v403, %v515
    %vm517 = vcmask 851712
    %v518 = vsel %vm517, %v516, %v511
    %v519 = vadd.s32 %v430, 4294967192
    %v520 = vlaneseq
    %v521 = vshrl.u32 %v520, 7
    %v522 = vsub.s32 %v519, %v521
    %v523 = vrot.slane %v406, %v522
    %vm524 = vcmask 917312
    %v525 = vsel %vm524, %v523, %v518
    %v526 = vadd.s32 %v430, 4294967184
    %v527 = vlaneseq
    %v528 = vshrl.u32 %v527, 7
    %v529 = vsub.s32 %v526, %v528
    %v530 = vrot.slane %v409, %v529
    %vm531 = vcmask 982912
    %v532 = vsel %vm531, %v530, %v525
    %v533 = vadd.s32 %v430, 4294967176
    %v534 = vlaneseq
    %v535 = vshrl.u32 %v534, 7
    %v536 = vsub.s32 %v533, %v535
    %v537 = vrot.slane %v412, %v536
    %vm538 = vcmask 1048512
    %v539 = vsel %vm538, %v537, %v532
    %541 = vst [vmem:[#allocation2] sm:$0x1] %v539
    // Predicated region
    $region10: #{tpu_custom_call.1} parent=1 // pred_check
      _
    $region11: #{tpu_custom_call.1} parent=1 // pred_check_branch
      %543 = sbr.rel (0) target = $region13
    $region12: #{tpu_custom_call.1} parent=1 // pred_region
      %s545 = ssub.s32 16, 16
      %546 = vsyncadd [#allocation3], %s545
      %s548 = sshll.u32 [#allocation2], 4
      %s549 = int_to_ptr.vmem [resolvable:$true] %s548
      %551 = dma.vmem_to_hbm [thread:$0]  %s549, 16, %s2, [#allocation3]
    $region13: #{tpu_custom_call.1} parent=1 // pred_fallthru
      _
    // Predicated region
    $region14: #{tpu_custom_call.1} parent=1 // pred_check
      _
    $region15: #{tpu_custom_call.1} parent=1 // pred_check_branch
      %553 = sbr.rel (0) target = $region17
    $region16: #{tpu_custom_call.1} parent=1 // pred_region
      %554 = dma.done [#allocation3], 16
    $region17: #{tpu_custom_call.1} parent=1 // pred_fallthru
      _
    %555 = vsyncpa [#allocation3], 1

</llo_original>
